<compile_context>
chip_gen: v7x
topology: tpu7x:2x2x1
jax: 0.10.0
libtpu: 0.0.40
codegen_flags: <defaults>
</compile_context>

<pallas_src>
import jax
import jax.numpy as jnp
from jax.experimental import pallas as pl
from jax.experimental.pallas import tpu as pltpu


def _conv1x1_kernel(x_ref, w_ref, b_ref, o_ref):
    # x_ref: (TB, Cin, TS)  w_ref: (TCo, Cin)  b_ref: (TCo, 1)  o_ref: (TB, TCo, TS)
    w = w_ref[...]
    b = b_ref[...]                       # (TCo, 1) broadcasts over the lane dim
    # Short static loop over the batch tile: each iteration is one MXU matmul.
    # (Casting w/x to bf16 here would speed up wide-channel compute-bound cases
    #  on v6e/v7x at an accuracy cost; kept f32-exact to match the reference.)
    for i in range(x_ref.shape[0]):
        acc = jnp.dot(w, x_ref[i], preferred_element_type=jnp.float32)
        o_ref[i] = (acc + b).astype(o_ref.dtype)


def _vmem_plan():
    """Return (tile_budget_bytes, vmem_limit_bytes) keyed off the chip's VMEM."""
    try:
        cap = int(pltpu.get_tpu_info().vmem_capacity_bytes)
    except Exception:
        cap = 64 * 1024 * 1024            # v7x-safe fallback
    # ~48 MiB limit on v7x (64 MiB physical), ~96 MiB on v5e/v6e (128 MiB).
    limit = min(cap * 3 // 4, 100 * 1024 * 1024)
    return limit // 3, limit


def _plan_tiles(n, cin, cout, hw, dtype_bytes, budget):
    """Choose (TB, TCo, TS) so double-buffered weight + activation + output
    blocks fit `budget`, with lane-dense (128-multiple or full-dim) TS."""
    # Resident weight + bias blocks (budget their double buffers; the (TCo, 1)
    # bias block lane-pads to 128 in VMEM).
    per_co_row = 2 * (cin + 128) * dtype_bytes
    tco = cout
    if cout * per_co_row > budget // 2 and cout % 8 == 0:
        tco = max(8, min(cout, (budget // 2 // per_co_row) // 8 * 8))
    act_budget = max(128 * dtype_bytes, budget - tco * per_co_row)

    per_col = 2 * (cin + tco) * dtype_bytes      # double-buffered x + out per column
    if per_col * hw <= act_budget:
        ts = hw                                   # whole image(s): contiguous slab DMA
        tb = max(1, min(n, act_budget // (per_col * hw)))
    else:
        tb = 1
        ts = max(128, (act_budget // per_col) // 128 * 128)
        ts = min(ts, hw if hw < 128 else (hw // 128) * 128)

    # v7x megacore: keep >= 2 grid steps so both TensorCores get work.
    def steps(tb_, ts_):
        return pl.cdiv(n, tb_) * pl.cdiv(hw, ts_) * pl.cdiv(cout, tco)

    while steps(tb, ts) < 2:
        if tb > 1:
            tb //= 2
        elif ts > 128:
            ts = max(128, ((ts // 2) + 127) // 128 * 128)
        else:
            break
    return tb, tco, ts


def conv3_forward(x_nchw, weight, bias):
    """1x1 conv. x_nchw: (N, Cin, H, W); weight: (Cout, Cin, 1, 1); bias: (Cout,)."""
    n, cin, h, w = x_nchw.shape
    cout = weight.shape[0]
    hw = h * w
    dtype_bytes = jnp.dtype(x_nchw.dtype).itemsize

    # Free reshapes in row-major NCHW (no transposes).
    x_rows = x_nchw.reshape(n, cin, hw)          # (N, Cin, HW)
    w_mat = weight.reshape(cout, cin)            # (Cout, Cin)
    b_col = bias.reshape(cout, 1)                # (Cout, 1)

    tile_budget, vmem_limit = _vmem_plan()
    tb, tco, ts = _plan_tiles(n, cin, cout, hw, dtype_bytes, tile_budget)
    # Cout axis outermost: the weight tile is fetched once per Cout tile and
    # stays resident while (batch, spatial) sweep; the activation tile's index
    # map is constant in `co`, so it is not re-fetched within a Cout tile.
    grid = (pl.cdiv(cout, tco), pl.cdiv(n, tb), pl.cdiv(hw, ts))

    cost = pl.CostEstimate(
        flops=2 * n * hw * cin * cout,
        transcendentals=0,
        bytes_accessed=dtype_bytes * (n * cin * hw + cin * cout + cout + n * cout * hw),
    )

    out_rows = pl.pallas_call(
        _conv1x1_kernel,
        out_shape=jax.ShapeDtypeStruct((n, cout, hw), x_nchw.dtype),
        grid_spec=pltpu.PrefetchScalarGridSpec(
            num_scalar_prefetch=0,
            grid=grid,
            in_specs=[
                pl.BlockSpec((tb, cin, ts), lambda co, b, s: (b, 0, s)),   # activations
                pl.BlockSpec((tco, cin), lambda co, b, s: (co, 0)),        # weight tile
                pl.BlockSpec((tco, 1), lambda co, b, s: (co, 0)),          # bias column
            ],
            out_specs=pl.BlockSpec((tb, tco, ts), lambda co, b, s: (b, co, s)),
        ),
        compiler_params=pltpu.CompilerParams(
            dimension_semantics=("parallel", "parallel", "parallel"),
            vmem_limit_bytes=vmem_limit,
        ),
        cost_estimate=cost,
    )(x_rows, w_mat, b_col)

    return out_rows.reshape(n, cout, h, w)


def conv3_reference(x_nchw, weight, bias):
    """Pure-JAX reference of the same 1x1 conv (for correctness check)."""
    w_mat = weight.reshape(weight.shape[0], weight.shape[1])  # (Cout, Cin)
    y = jnp.einsum("nchw,oc->nohw", x_nchw, w_mat)
    return y + bias.reshape(1, -1, 1, 1)


if __name__ == "__main__":
    key = jax.random.PRNGKey(0)
    k_x, k_w, k_b = jax.random.split(key, 3)

    batch, in_chs, out_chs, spatial = 2, 4, 8, 16
    x = jax.random.normal(k_x, (batch, in_chs, spatial, spatial), dtype=jnp.float32)
    # Deterministic synthetic parameters (shapes match nn.Conv2d(in_chs, out_chs, 1)).
    weight = jax.random.normal(k_w, (out_chs, in_chs, 1, 1), dtype=jnp.float32) * 0.1
    bias = jax.random.normal(k_b, (out_chs,), dtype=jnp.float32) * 0.1

    y = conv3_forward(x, weight, bias)
    y = jax.block_until_ready(y)

    y_ref = conv3_reference(x, weight, bias)
    assert y.shape == (batch, out_chs, spatial, spatial)
    assert jnp.allclose(y, y_ref, atol=1e-5, rtol=1e-5)

    print("KERNEL_OK")
</pallas_src>

<mosaic_0001>
module attributes {stable_mosaic.version = 11 : i64} {
  func.func @_conv1x1_kernel(%arg0: i32, %arg1: i32, %arg2: i32, %arg3: memref<1x4x256xf32, #tpu.memory_space<vmem>>, %arg4: memref<8x4xf32, #tpu.memory_space<vmem>>, %arg5: memref<8x1xf32, #tpu.memory_space<vmem>>, %arg6: memref<1x8x256xf32, #tpu.memory_space<vmem>>) attributes {dimension_semantics = [#tpu.dimension_semantics<parallel>, #tpu.dimension_semantics<parallel>, #tpu.dimension_semantics<parallel>], iteration_bounds = array<i64: 1, 2, 1>, scalar_prefetch = 0 : i64, scratch_operands = 0 : i64, tpu.core_type = #tpu.core_type<tc>, window_params = [{transform_indices = @transform_0, window_bounds = array<i64: 1, 4, 256>}, {transform_indices = @transform_1, window_bounds = array<i64: 8, 4>}, {transform_indices = @transform_2, window_bounds = array<i64: 8, 1>}, {transform_indices = @transform_3, window_bounds = array<i64: 1, 8, 256>}]} {
    %c0 = arith.constant 0 : index
    %c0_0 = arith.constant 0 : index
    %0 = vector.load %arg4[%c0, %c0_0] : memref<8x4xf32, #tpu.memory_space<vmem>>, vector<8x4xf32>
    %c0_1 = arith.constant 0 : index
    %c0_2 = arith.constant 0 : index
    %1 = vector.load %arg5[%c0_1, %c0_2] : memref<8x1xf32, #tpu.memory_space<vmem>>, vector<8x1xf32>
    %c0_3 = arith.constant 0 : index
    %c0_4 = arith.constant 0 : index
    %c0_5 = arith.constant 0 : index
    %2 = vector.load %arg3[%c0_3, %c0_4, %c0_5] : memref<1x4x256xf32, #tpu.memory_space<vmem>>, vector<1x4x256xf32>
    %3 = vector.shape_cast %2 : vector<1x4x256xf32> to vector<4x256xf32>
    %cst = arith.constant dense<0.000000e+00> : vector<8x256xf32>
    %4 = tpu.matmul %0, %3, %cst {dimension_numbers = #tpu.dot_dimension_numbers<[1], [0], [0], [1], [0, 0, 1, 1], [], []>} : vector<8x4xf32>, vector<4x256xf32>, vector<8x256xf32> -> vector<8x256xf32>
    %5 = vector.broadcast %1 : vector<8x1xf32> to vector<8x256xf32>
    %6 = arith.addf %4, %5 : vector<8x256xf32>
    %c0_6 = arith.constant 0 : index
    %c0_7 = arith.constant 0 : index
    %c0_8 = arith.constant 0 : index
    %7 = vector.load %arg6[%c0_6, %c0_7, %c0_8] : memref<1x8x256xf32, #tpu.memory_space<vmem>>, vector<1x8x256xf32>
    %8 = vector.shape_cast %7 : vector<1x8x256xf32> to vector<8x256xf32>
    %9 = vector.shape_cast %6 : vector<8x256xf32> to vector<1x8x256xf32>
    tpu.vector_store %arg6[%c0_6, %c0_7, %c0_8], %9 {strides = array<i32>} : memref<1x8x256xf32, #tpu.memory_space<vmem>>, vector<1x8x256xf32>,
    return
  }
  func.func @transform_0(%arg0: i32, %arg1: i32, %arg2: i32) -> (i32, i32, i32) {
    %c0_i32 = arith.constant 0 : i32
    %c0_i32_0 = arith.constant 0 : i32
    return %arg1, %c0_i32, %arg2 : i32, i32, i32
  }
  func.func @transform_1(%arg0: i32, %arg1: i32, %arg2: i32) -> (i32, i32) {
    %c0_i32 = arith.constant 0 : i32
    %c0_i32_0 = arith.constant 0 : i32
    return %arg0, %c0_i32 : i32, i32
  }
  func.func @transform_2(%arg0: i32, %arg1: i32, %arg2: i32) -> (i32, i32) {
    %c0_i32 = arith.constant 0 : i32
    %c0_i32_0 = arith.constant 0 : i32
    return %arg0, %c0_i32 : i32, i32
  }
  func.func @transform_3(%arg0: i32, %arg1: i32, %arg2: i32) -> (i32, i32, i32) {
    %c0_i32 = arith.constant 0 : i32
    return %arg1, %arg0, %arg2 : i32, i32, i32
  }
}

</mosaic_0001>

<llo_original>
// kernel: tpu_custom_call.1
$region0: #{tpu_custom_call.1}
  #allocation0 [shape = 'u32[]', space=smem, size = 0x4, offset = 0x4, fixed_abs, tag = 'smem constant byte address 0x4 - core index']
  #allocation1 [shape = 'u32[144,128]{1,0:T(1,128)}', space=vmem, size = 0x12000, scoped, tag = 'internal scratch']
  %s0 = inlined_call_operand.vmem [shape: f32[2,4,256], index: 0, kind: input, shape index: {}]
  %s1 = inlined_call_operand.vmem [shape: f32[8,4], index: 1, kind: input, shape index: {}]
  %s2 = inlined_call_operand.vmem [shape: f32[8,1], index: 2, kind: input, shape index: {}]
  %s3 = inlined_call_operand.hbm [shape: f32[2,8,256], index: 3, kind: output, shape index: {}]
  %s4 = sld [smem:[#allocation0]]
  $region45: #{tpu_custom_call.1} parent=0
    _
  %s6 = ssub.s32 1, %s4
  %s7 = scalar_select 0, %s6, %s4
  $region1: #{tpu_custom_call.1} parent=0
    #allocation2 [shape = 'u8[16384]{0}', space=vmem, size = 0x4000, scoped, tag = 'output window, operand 0']
    #allocation3 [shape = 's32[2]{0}', space=sflag, size = 0x8, scoped, tag = 'scoped memory for tpu_custom_call.1']
    %8 = vsyncpa [#allocation3], 0
    %s9 = scalar_lea.sflag [#allocation3], 1
    %10 = vsyncpa %s9, 0
    loop: start=0, step=1, limit=4
    $region2: #{tpu_custom_call.1} parent=1 // loop_pre_header
      _
    $region3: #{tpu_custom_call.1} parent=1 // loop_header
      %s12 = sphi 0, %s16
      %p13 = scmp.ge.s32.totalorder %s12, 4
      %s19 = sphi 0, %s38
      %s20 = sphi 0, %s34
      %s21 = sphi 0, %s30
      %s22 = sphi 0, %s19
      %s23 = sphi 0, %s20
      %s24 = sphi 0, %s21
      %s25 = sphi 0, %s22
      %s26 = sphi 0, %s23
      %s27 = sphi 0, %s24
      %s43 = sphi 0, %s45
      %s46 = sphi 0, %s43
      %s47 = sphi 0, %s46
      %s63 = sphi 0, %s47
      %s69 = sphi 0, %s71
      %s72 = sphi 0, %s69
      %s73 = sphi 0, %s72
      %s89 = sphi 0, %s73
      %s95 = sphi 0, %s97
      %s98 = sphi 0, %s95
      %s99 = sphi 0, %s98
      %s115 = sphi 0, %s99
      %s125 = sphi 0, %s127
      %s128 = sphi 0, %s125
      %s129 = sphi 0, %s128
      %s145 = sphi 0, %s129
    $region4: #{tpu_custom_call.1} parent=1 // loop_header_branch
      %15 = sbr.rel (%p13) target = $region8
    $region5: #{tpu_custom_call.1} parent=1 // loop_body
      %s17 = ssub.s32 %s12, 1
      %s18 = ssub.s32 %s12, 2
      %s28 = sadd.s32 1, %s21
      %p29 = scmp.ge.s32.totalorder %s28, 1
      %s30 = scalar_select %p29, 0, %s28
      %s31 = sadd.s32 1, %s20
      %s32 = scalar_select %p29, %s31, %s20
      %p33 = scmp.ge.s32.totalorder %s32, 2
      %s34 = scalar_select %p33, 0, %s32
      %s35 = sadd.s32 1, %s19
      %s36 = scalar_select %p33, %s35, %s19
      %p37 = scmp.ge.s32.totalorder %s36, 1
      %s38 = scalar_select %p37, 0, %s36
      %s39 = ssub.s32 %s20, %s34
      %s40 = ssub.s32 %s21, %s30
      %s41 = sor.u32 %s39, %s40
      %p42 = scmp.eq.s32.totalorder %s41, 0
      %s44 = sadd.s32 %s43, 1
      %s45 = scalar_select %p42, %s43, %s44
      %p48 = pneg %p42
      %p49 = scmp.eq.s32.totalorder %s12, 1
      %p50 = por %p48, %p49
      %p51 = scmp.ne.s32.totalorder %s43, %s46
      %p52 = scmp.eq.s32.totalorder %s12, 0
      %p53 = por %p51, %p52
      %p54 = scmp.ne.s32.totalorder %s43, %s46
      %p55 = scmp.eq.s32.totalorder %s17, 1
      %p56 = por %p54, %p55
      %p57 = scmp.ne.s32.totalorder %s46, %s47
      %p58 = scmp.eq.s32.totalorder %s17, 0
      %p59 = por %p57, %p58
      %p60 = scmp.ne.s32.totalorder %s46, %s47
      %p61 = scmp.eq.s32.totalorder %s18, 1
      %p62 = por %p60, %p61
      %p64 = scmp.ne.s32.totalorder %s47, %s63
      %p65 = scmp.eq.s32.totalorder %s18, 0
      %p66 = por %p64, %p65
      %s67 = ssub.s32 %s19, %s38
      %p68 = scmp.eq.s32.totalorder %s67, 0
      %s70 = sadd.s32 %s69, 1
      %s71 = scalar_select %p68, %s69, %s70
      %p74 = pneg %p68
      %p75 = scmp.eq.s32.totalorder %s12, 1
      %p76 = por %p74, %p75
      %p77 = scmp.ne.s32.totalorder %s69, %s72
      %p78 = scmp.eq.s32.totalorder %s12, 0
      %p79 = por %p77, %p78
      %p80 = scmp.ne.s32.totalorder %s69, %s72
      %p81 = scmp.eq.s32.totalorder %s17, 1
      %p82 = por %p80, %p81
      %p83 = scmp.ne.s32.totalorder %s72, %s73
      %p84 = scmp.eq.s32.totalorder %s17, 0
      %p85 = por %p83, %p84
      %p86 = scmp.ne.s32.totalorder %s72, %s73
      %p87 = scmp.eq.s32.totalorder %s18, 1
      %p88 = por %p86, %p87
      %p90 = scmp.ne.s32.totalorder %s73, %s89
      %p91 = scmp.eq.s32.totalorder %s18, 0
      %p92 = por %p90, %p91
      %s93 = ssub.s32 %s19, %s38
      %p94 = scmp.eq.s32.totalorder %s93, 0
      %s96 = sadd.s32 %s95, 1
      %s97 = scalar_select %p94, %s95, %s96
      %p100 = pneg %p94
      %p101 = scmp.eq.s32.totalorder %s12, 1
      %p102 = por %p100, %p101
      %p103 = scmp.ne.s32.totalorder %s95, %s98
      %p104 = scmp.eq.s32.totalorder %s12, 0
      %p105 = por %p103, %p104
      %p106 = scmp.ne.s32.totalorder %s95, %s98
      %p107 = scmp.eq.s32.totalorder %s17, 1
      %p108 = por %p106, %p107
      %p109 = scmp.ne.s32.totalorder %s98, %s99
      %p110 = scmp.eq.s32.totalorder %s17, 0
      %p111 = por %p109, %p110
      %p112 = scmp.ne.s32.totalorder %s98, %s99
      %p113 = scmp.eq.s32.totalorder %s18, 1
      %p114 = por %p112, %p113
      %p116 = scmp.ne.s32.totalorder %s99, %s115
      %p117 = scmp.eq.s32.totalorder %s18, 0
      %p118 = por %p116, %p117
      %s119 = ssub.s32 %s20, %s34
      %s120 = ssub.s32 %s19, %s38
      %s121 = sor.u32 %s119, %s120
      %s122 = ssub.s32 %s21, %s30
      %s123 = sor.u32 %s121, %s122
      %p124 = scmp.eq.s32.totalorder %s123, 0
      %s126 = sadd.s32 %s125, 1
      %s127 = scalar_select %p124, %s125, %s126
      %p130 = pneg %p124
      %p131 = scmp.eq.s32.totalorder %s12, 1
      %p132 = por %p130, %p131
      %p133 = scmp.ne.s32.totalorder %s125, %s128
      %p134 = scmp.eq.s32.totalorder %s12, 0
      %p135 = por %p133, %p134
      %p136 = scmp.ne.s32.totalorder %s125, %s128
      %p137 = scmp.eq.s32.totalorder %s17, 1
      %p138 = por %p136, %p137
      %p139 = scmp.ne.s32.totalorder %s128, %s129
      %p140 = scmp.eq.s32.totalorder %s17, 0
      %p141 = por %p139, %p140
      %p142 = scmp.ne.s32.totalorder %s128, %s129
      %p143 = scmp.eq.s32.totalorder %s18, 1
      %p144 = por %p142, %p143
      %p146 = scmp.ne.s32.totalorder %s129, %s145
      %p147 = scmp.eq.s32.totalorder %s18, 0
      %p148 = por %p146, %p147
      %p149 = scmp.le.s32.totalorder 1, %s12
      %p150 = scmp.lt.s32.totalorder %s12, 3
      %p151 = pnand %p149, %p150
      %p152 = pneg %p151
      // Predicated region
      $region9: #{tpu_custom_call.1} parent=5 // pred_check
        _
      $region10: #{tpu_custom_call.1} parent=5 // pred_check_branch
        %154 = sbr.rel (%p151) target = $region12
      $region11: #{tpu_custom_call.1} parent=5 // pred_region
        %s155 = ssub.s32 %s12, 1
        // Predicated region
        $region13: #{tpu_custom_call.1} parent=11 // pred_check
          %p156 = pneg %p85
        $region14: #{tpu_custom_call.1} parent=11 // pred_check_branch
          %158 = sbr.rel (%p156) target = $region16
        $region15: #{tpu_custom_call.1} parent=11 // pred_region
          %p159 = scmp.lt.s32.totalorder %s22, 0
          %s160 = scalar_select %p159, %s22, 0
          %s161 = smul.addr %s160, 8
          %s162 = scalar_lea.vmem %s1, %s161
        $region16: #{tpu_custom_call.1} parent=11 // pred_fallthru
          _
        // Predicated region
        $region17: #{tpu_custom_call.1} parent=11 // pred_check
          %p163 = pneg %p111
        $region18: #{tpu_custom_call.1} parent=11 // pred_check_branch
          %165 = sbr.rel (%p163) target = $region20
        $region19: #{tpu_custom_call.1} parent=11 // pred_region
          %p166 = scmp.lt.s32.totalorder %s22, 0
          %s167 = scalar_select %p166, %s22, 0
          %s168 = smul.addr %s167, 8
          %s169 = scalar_lea.vmem %s2, %s168
        $region20: #{tpu_custom_call.1} parent=11 // pred_fallthru
          _
      $region12: #{tpu_custom_call.1} parent=5 // pred_fallthru
        _
      %p170 = scmp.lt.s32.totalorder %s12, 2
      // Predicated region
      $region21: #{tpu_custom_call.1} parent=5 // pred_check
        %p171 = pneg %p170
      $region22: #{tpu_custom_call.1} parent=5 // pred_check_branch
        %173 = sbr.rel (%p171) target = $region24
      $region23: #{tpu_custom_call.1} parent=5 // pred_region
        // Predicated region
        $region25: #{tpu_custom_call.1} parent=23 // pred_check
          %p174 = pneg %p53
        $region26: #{tpu_custom_call.1} parent=23 // pred_check_branch
          %176 = sbr.rel (%p174) target = $region28
        $region27: #{tpu_custom_call.1} parent=23 // pred_region
          %s177 = smul.u32 2, %s21
          %p178 = scmp.lt.s32.totalorder %s20, 1
          %s179 = scalar_select %p178, %s20, 1
          %p180 = scmp.lt.s32.totalorder %s177, 1
          %s181 = scalar_select %p180, %s177, 1
          %s182 = smul.addr %s179, 2
          %s183 = sadd.s32 %s181, %s182
          %s184 = smul.addr %s183, 4
          %s185 = scalar_lea.vmem %s0, %s184
          %s186 = smul.u32 2, %s21
        $region28: #{tpu_custom_call.1} parent=23 // pred_fallthru
          _
      $region24: #{tpu_custom_call.1} parent=5 // pred_fallthru
        _
      %p187 = scmp.le.s32.totalorder 1, %s12
      %p188 = scmp.lt.s32.totalorder %s12, 3
      %p189 = pnand %p187, %p188
      %p190 = pneg %p189
      // Predicated region
      $region29: #{tpu_custom_call.1} parent=5 // pred_check
        _
      $region30: #{tpu_custom_call.1} parent=5 // pred_check_branch
        %192 = sbr.rel (%p189) target = $region32
      $region31: #{tpu_custom_call.1} parent=5 // pred_region
        %s193 = ssub.s32 %s12, 1
        %s194 = smul.u32 2, %s24
        %p195 = scmp.lt.s32.totalorder %s23, 1
        %s196 = scalar_select %p195, %s23, 1
        %p197 = scmp.lt.s32.totalorder %s194, 1
        %s198 = scalar_select %p197, %s194, 1
        %s199 = smul.addr %s196, 2
        %s200 = sadd.s32 %s198, %s199
        %s201 = smul.addr %s200, 4
        %s202 = scalar_lea.vmem %s0, %s201
        %p203 = pneg %p59
        %p204 = pneg %p56
        %p205 = scmp.lt.s32.totalorder %s22, 0
        %s206 = scalar_select %p205, %s22, 0
        %s207 = smul.addr %s206, 8
        %s208 = scalar_lea.vmem %s1, %s207
        %p209 = pneg %p85
        %p210 = pneg %p82
        %p211 = scmp.lt.s32.totalorder %s22, 0
        %s212 = scalar_select %p211, %s22, 0
        %s213 = smul.addr %s212, 8
        %s214 = scalar_lea.vmem %s2, %s213
        %p215 = pneg %p111
        %p216 = pneg %p108
        %p217 = pneg %p141
        %p218 = pneg %p138
        %s219 = sand.u32 %s128, 1
        %s220 = scalar_lea.sflag [#allocation3], %s219
        %s221 = sand.u32 %s128, 1
        %s222 = smul.addr %s221, 16
        %s223 = scalar_lea.vmem [#allocation2], %s222
        %s224 = smul.u32 2, %s24
        %p225 = scmp.lt.s32.totalorder %s23, 1
        %s226 = scalar_select %p225, %s23, 1
        %p227 = scmp.lt.s32.totalorder %s224, 1
        %s228 = scalar_select %p227, %s224, 1
        %s229 = smul.addr %s226, 2
        %s230 = sadd.s32 %s228, %s229
        %s231 = smul.addr %s230, 4
        %s232 = scalar_lea.vmem %s0, %s231
        %s233 = smul.u32 2, %s24
        %p234 = scmp.lt.s32.totalorder %s22, 0
        %s235 = scalar_select %p234, %s22, 0
        %s236 = smul.addr %s235, 8
        %s237 = scalar_lea.vmem %s1, %s236
        %p238 = scmp.lt.s32.totalorder %s22, 0
        %s239 = scalar_select %p238, %s22, 0
        %s240 = smul.addr %s239, 8
        %s241 = scalar_lea.vmem %s2, %s240
        %s242 = smul.u32 2, %s24
        %v243 = vld [vmem:[%s237] sm:$0xff]
        %v244 = vld [vmem:[%s241] sm:$0xff]
        %v245 = vld [vmem:[%s232] sm:$0xff]
        %247 = vset.pattern.permute.xlu0 0
        %248 = vperm.xlu0 %247, %v244
        %v249 = vpop.permute.xlu0 %248
        %v252 = vcombine.high %v245, %v245
        %vm253 = vcmask 31744
        %v255 = vsel %vm253, %v243, 0
        %vm257 = vcmask 1043456
        %v258 = vsel %vm257, %v245, 0
        %v260 = vsel %vm257, %v252, 0
        %262 = vmatprep.subr.mxu0 %v260
        %263 = vmatpush1.msra.mxu0 %v258
        %264 = vmatprep.subr.mxu0 0.0
        %265 = vmatpush1.msra.mxu0 0.0
        %266 = vmatprep.subr.mxu0 0.0
        %267 = vmatpush1.msra.mxu0 0.0
        %268 = vmatprep.subr.mxu0 0.0
        %269 = vmatpush1.msra.mxu0 0.0
        %270 = vmatprep.subr.mxu0 0.0
        %271 = vmatpush1.msra.mxu0 0.0
        %272 = vmatprep.subr.mxu0 0.0
        %273 = vmatpush1.msra.mxu0 0.0
        %274 = vmatprep.subr.mxu0 0.0
        %275 = vmatpush1.msra.mxu0 0.0
        %276 = vmatprep.subr.mxu0 0.0
        %277 = vmatpush1.msra.mxu0 0.0
        %278 = vmatprep.subr.mxu0 0.0
        %279 = vmatpush1.msra.mxu0 0.0
        %280 = vmatprep.subr.mxu0 0.0
        %281 = vmatpush1.msra.mxu0 0.0
        %282 = vmatprep.subr.mxu0 0.0
        %283 = vmatpush1.msra.mxu0 0.0
        %284 = vmatprep.subr.mxu0 0.0
        %285 = vmatpush1.msra.mxu0 0.0
        %286 = vmatprep.subr.mxu0 0.0
        %287 = vmatpush1.msra.mxu0 0.0
        %288 = vmatprep.subr.mxu0 0.0
        %289 = vmatpush1.msra.mxu0 0.0
        %290 = vmatprep.subr.mxu0 0.0
        %291 = vmatpush1.msra.mxu0 0.0
        %292 = vmatprep.subr.mxu0 0.0
        %293 = vmatpush1.msra.mxu0 0.0
        %294 = vmatprep.subr.mxu0 0.0
        %295 = vmatpush1.msra.mxu0 0.0
        %296 = vmatprep.subr.mxu0 0.0
        %297 = vmatpush1.msra.mxu0 0.0
        %298 = vmatprep.subr.mxu0 0.0
        %299 = vmatpush1.msra.mxu0 0.0
        %300 = vmatprep.subr.mxu0 0.0
        %301 = vmatpush1.msra.mxu0 0.0
        %302 = vmatprep.subr.mxu0 0.0
        %303 = vmatpush1.msra.mxu0 0.0
        %304 = vmatprep.subr.mxu0 0.0
        %305 = vmatpush1.msra.mxu0 0.0
        %306 = vmatprep.subr.mxu0 0.0
        %307 = vmatpush1.msra.mxu0 0.0
        %308 = vmatprep.subr.mxu0 0.0
        %309 = vmatpush1.msra.mxu0 0.0
        %310 = vmatprep.subr.mxu0 0.0
        %311 = vmatpush1.msra.mxu0 0.0
        %312 = vmatprep.subr.mxu0 0.0
        %313 = vmatpush1.msra.mxu0 0.0
        %314 = vmatprep.subr.mxu0 0.0
        %315 = vmatpush1.msra.mxu0 0.0
        %316 = vmatprep.subr.mxu0 0.0
        %317 = vmatpush1.msra.mxu0 0.0
        %318 = vmatprep.subr.mxu0 0.0
        %319 = vmatpush1.msra.mxu0 0.0
        %320 = vmatprep.subr.mxu0 0.0
        %321 = vmatpush1.msra.mxu0 0.0
        %322 = vmatprep.subr.mxu0 0.0
        %323 = vmatpush1.msra.mxu0 0.0
        %324 = vmatprep.subr.mxu0 0.0
        %325 = vmatpush1.msra.mxu0 0.0
        %326 = vmatprep.mubr.f32.mxu0 0.0
        %327 = vmatmul.mubr.f32.gmra.mrb[0].mxu0 %v255
        %v328 = vpop.f32.mrb[0].mxu0
        %v329 = vadd.f32 %v249, %v328
        %v330 = vpop.f32.mrb[0].mxu0
        %v331 = vadd.f32 %v249, %v330
        %332 = vdwg.mxu0
        %333 = vst [vmem:[%s223] sm:$0xff] %v329
        %334 = vst [vmem:[%s223 + $0x8] sm:$0xff] %v331
        %s335 = sand.u32 %s128, 1
        %s336 = scalar_lea.sflag [#allocation3], %s335
        %s337 = sand.u32 %s128, 1
        %s338 = smul.addr %s337, 16
        %s339 = scalar_lea.vmem [#allocation2], %s338
        // Predicated region
        $region33: #{tpu_custom_call.1} parent=31 // pred_check
          %p340 = pneg %p138
        $region34: #{tpu_custom_call.1} parent=31 // pred_check_branch
          %342 = sbr.rel (%p340) target = $region36
        $region35: #{tpu_custom_call.1} parent=31 // pred_region
          %s343 = smul.u32 2, %s24
          %s345 = ssub.s32 256, 256
          %346 = vsyncadd %s336, %s345
          %s347 = smul.addr %s22, 2
          %s348 = sadd.s32 %s343, %s347
          %s349 = smul.addr %s23, 2
          %s350 = sadd.s32 %s348, %s349
          %s351 = smul.addr %s350, 128
          %s352 = scalar_lea.hbm %s3, %s351
          %s354 = sshll.u32 %s339, 4
          %s355 = int_to_ptr.vmem [resolvable:$true] %s354
          %357 = dma.vmem_to_hbm [thread:$0]  %s355, 256, %s352, %s336
        $region36: #{tpu_custom_call.1} parent=31 // pred_fallthru
          _
      $region32: #{tpu_custom_call.1} parent=5 // pred_fallthru
        _
      %p358 = scmp.le.s32.totalorder 2, %s12
      // Predicated region
      $region37: #{tpu_custom_call.1} parent=5 // pred_check
        %p359 = pneg %p358
      $region38: #{tpu_custom_call.1} parent=5 // pred_check_branch
        %361 = sbr.rel (%p359) target = $region40
      $region39: #{tpu_custom_call.1} parent=5 // pred_region
        %s362 = ssub.s32 %s12, 2
        // Predicated region
        $region41: #{tpu_custom_call.1} parent=39 // pred_check
          %p363 = pneg %p144
        $region42: #{tpu_custom_call.1} parent=39 // pred_check_branch
          %365 = sbr.rel (%p363) target = $region44
        $region43: #{tpu_custom_call.1} parent=39 // pred_region
          %s366 = sand.u32 %s129, 1
          %s367 = scalar_lea.sflag [#allocation3], %s366
          %s368 = sand.u32 %s129, 1
          %s369 = smul.addr %s368, 16
          %s370 = scalar_lea.vmem [#allocation2], %s369
          %371 = dma.done %s367, 256
        $region44: #{tpu_custom_call.1} parent=39 // pred_fallthru
          _
      $region40: #{tpu_custom_call.1} parent=5 // pred_fallthru
        _
    $region6: #{tpu_custom_call.1} parent=1 // loop_footer
      %s16 = sadd.s32 1, %s12
    $region7: #{tpu_custom_call.1} parent=1 // loop_footer_branch
      %11 = sbr.rel target = $region3
    $region8: #{tpu_custom_call.1} parent=1 // loop_exit
      _
    %372 = vsyncpa [#allocation3], 1
    %s373 = scalar_lea.sflag [#allocation3], 1
    %374 = vsyncpa %s373, 1

</llo_original>
